<compile_context>
chip_gen: v6e
topology: v6e:2x2x1
jax: 0.10.0
libtpu: 0.0.40
codegen_flags: <defaults>
</compile_context>

<pallas_src>
from functools import partial

import jax
import jax.numpy as jnp
from jax import lax
from jax.experimental import pallas as pl
from jax.experimental.pallas import tpu as pltpu


_LANES = 128


def _round_up(x, m):
    return ((x + m - 1) // m) * m


def _cdiv(a, b):
    return -(-a // b)


def _vmem_capacity_bytes():
    default = 64 * 1024 * 1024  # conservative (v7x physical VMEM per TC)
    try:
        info = pltpu.get_tpu_info()
        return int(getattr(info, "vmem_capacity_bytes", default))
    except Exception:
        return default


def _choose_tile_rows(n_rows, width, itemsize, vmem_limit_bytes, sublane):
    """Row-tile size under an honest VMEM budget.

    Per-row working set (conservative):
      * double-buffered input + output tiles        -> 4 * itemsize bytes
      * live f32 intermediates (x_f32, x*x, y, slack) -> ~4 * 4 bytes
    """
    # Generation-aware input-bytes target per grid step.
    target_bytes = 8 * 2**20 if vmem_limit_bytes <= 48 * 2**20 else 16 * 2**20

    bytes_per_row = width * (4 * itemsize + 16)
    budget_rows = int(vmem_limit_bytes * 0.8) // max(bytes_per_row, 1)
    target_rows = target_bytes // max(width * itemsize, 1)
    tr = min(budget_rows, target_rows)

    # Guarantee >=4 grid steps when possible (pipelining depth + megacore).
    if n_rows >= 4 * sublane:
        tr = min(tr, _round_up(_cdiv(n_rows, 4), sublane))

    if tr >= n_rows:
        # One block equal to the full array dims (always a legal block shape).
        return int(max(n_rows, 1))

    tr = max(sublane, (tr // sublane) * sublane)
    return int(tr)


# --------------------------------------------------------------------------
# Kernels
# --------------------------------------------------------------------------
def _ln_kernel(x_ref, w_ref, b_ref, o_ref, *, eps):
    """Unpacked path: normalization axis is the lane axis (d >= 128 etc.)."""
    x = x_ref[...].astype(jnp.float32)
    d = x.shape[-1]
    inv_d = jnp.float32(1.0 / d)
    # Two independent moments (dual-issue on the XLUs); no full-tile `xc`
    # intermediate during the reduction phase.
    s1 = jnp.sum(x, axis=-1, keepdims=True)
    s2 = jnp.sum(x * x, axis=-1, keepdims=True)
    mean = s1 * inv_d
    var = jnp.maximum(s2 * inv_d - mean * mean, 0.0)   # biased; guard cancellation
    inv = lax.rsqrt(var + eps)
    w = w_ref[...].astype(jnp.float32)
    b = b_ref[...].astype(jnp.float32)
    o_ref[...] = ((x - mean) * inv * w + b).astype(o_ref.dtype)


def _ln_packed_kernel(x_ref, w_ref, b_ref, o_ref, *, d, eps):
    """Lane-dense path for d < 128 (128 % d == 0): g = 128 // d rows per lane-row.

    Both moments are reduced with a single interleaved hypercube segmented
    lane all-reduce (XLU rolls + VPU select/add); the log2(d) lane masks are
    computed once and shared by the two sums.
    """
    x = x_ref[...].astype(jnp.float32)
    x2 = x * x
    lane = lax.broadcasted_iota(jnp.int32, x.shape, 1)
    inv_d = jnp.float32(1.0 / d)

    s1, s2 = x, x2
    s = 1
    while s < d:
        hi = (lane & s) != 0                      # mask hoisted, shared by both sums
        s1 = s1 + jnp.where(hi,
                            pltpu.roll(s1, shift=s, axis=1),           # lane j <- j - s
                            pltpu.roll(s1, shift=_LANES - s, axis=1))  # lane j <- j + s
        s2 = s2 + jnp.where(hi,
                            pltpu.roll(s2, shift=s, axis=1),
                            pltpu.roll(s2, shift=_LANES - s, axis=1))
        s *= 2

    mean = s1 * inv_d
    var = jnp.maximum(s2 * inv_d - mean * mean, 0.0)
    inv = lax.rsqrt(var + eps)
    w = w_ref[...].astype(jnp.float32)
    b = b_ref[...].astype(jnp.float32)
    o_ref[...] = ((x - mean) * inv * w + b).astype(o_ref.dtype)


# --------------------------------------------------------------------------
# Wrapper
# --------------------------------------------------------------------------
def modified_ln_forward(x, weight, bias, current_subset_dim, *, eps=1e-5):
    """Pallas equivalent of ModifiedLN.forward after configure_subnetwork(d).

    x: (..., d) with d == current_subset_dim
    weight, bias: (embed_dim,) full parameters; the prefix [:d] is used.
    """
    d = int(current_subset_dim)
    assert x.shape[-1] == d, "last dim of x must equal current_subset_dim"
    assert weight.shape[0] >= d and bias.shape[0] >= d

    sub_w = weight[:d]
    sub_b = bias[:d]

    orig_shape = x.shape
    rows = 1
    for s in orig_shape[:-1]:
        rows *= s
    if rows == 0:
        return x
    x2d = x.reshape(rows, d)

    # Lane-dense packing when d < 128 and divides 128 (d is then a power of 2).
    # TODO(synk): d < 128 that does NOT divide 128 (e.g. 48, 96 from the
    # default 192 * [1/4, 1/2] config) still takes the unpacked path with a
    # sub-128 lane width (masked stores); lcm-group packing not implemented.
    packed = (d < _LANES) and (_LANES % d == 0)
    pad = 0
    if packed:
        g = _LANES // d
        n_rows = _cdiv(rows, g)
        pad = n_rows * g - rows
        if pad:
            # Structurally required to form whole (rows-per-lane-row) groups.
            x2d = jnp.pad(x2d, ((0, pad), (0, 0)))
        xw = x2d.reshape(n_rows, _LANES)          # g original rows per lane-row
        w_in = jnp.tile(sub_w, g).reshape(1, _LANES)
        b_in = jnp.tile(sub_b, g).reshape(1, _LANES)
        width = _LANES
        kernel = partial(_ln_packed_kernel, d=d, eps=eps)
    else:
        xw = x2d
        w_in = sub_w.reshape(1, d)
        b_in = sub_b.reshape(1, d)
        width = d
        n_rows = rows
        kernel = partial(_ln_kernel, eps=eps)

    itemsize = jnp.dtype(x.dtype).itemsize
    sublane = max(8, 32 // itemsize)                       # 8 f32 / 16 bf16 / 32 int8
    vmem_bytes = _vmem_capacity_bytes()
    vmem_limit = int(max(vmem_bytes - 16 * 2**20, 32 * 2**20))
    tile_rows = _choose_tile_rows(n_rows, width, itemsize, vmem_limit, sublane)

    # No row padding: ragged final block is fine for a purely row-wise op
    # (OOB reads only feed OOB output rows, which Pallas drops).
    n_tiles = _cdiv(n_rows, tile_rows)

    out = pl.pallas_call(
        kernel,
        out_shape=jax.ShapeDtypeStruct((n_rows, width), x.dtype),
        grid_spec=pltpu.PrefetchScalarGridSpec(
            num_scalar_prefetch=0,
            grid=(n_tiles,),
            in_specs=[
                pl.BlockSpec((tile_rows, width), lambda i: (i, 0)),  # x tile
                # Constant block index -> fetched once, resident across steps.
                pl.BlockSpec((1, width), lambda i: (0, 0)),          # weight
                pl.BlockSpec((1, width), lambda i: (0, 0)),          # bias
            ],
            out_specs=pl.BlockSpec((tile_rows, width), lambda i: (i, 0)),
        ),
        compiler_params=pltpu.CompilerParams(
            dimension_semantics=("parallel",),   # megacore-shardable rows
            vmem_limit_bytes=vmem_limit,         # >=16 MiB headroom on-chip
        ),
    )(xw, w_in, b_in)

    if packed:
        out = out.reshape(n_rows * g, d)
        if pad:
            out = out[:rows]
    return out.reshape(orig_shape)


# TODO(synk): expand_subnetwork_fpi / configure_subnetwork are host-side
# parameter/state management; they stay as plain Python/JAX glue (no kernel).


if __name__ == "__main__":
    key = jax.random.PRNGKey(0)
    k_x, k_w, k_b, k_x2, k_w2, k_b2, k_x3, k_w3, k_b3 = jax.random.split(key, 9)

    def ref_ln(x, w, b, d, eps=1e-5):
        xf = x.astype(jnp.float32)
        mean = jnp.mean(xf, axis=-1, keepdims=True)
        var = jnp.mean((xf - mean) ** 2, axis=-1, keepdims=True)
        return (xf - mean) / jnp.sqrt(var + eps) * w[:d] + b[:d]

    # --- Test 1: small d (packed lane-dense path) with a group-pad tail ----
    embed_dim = 32
    subset_dim = 16          # configure_subnetwork(16)
    B, N = 2, 5              # rows = 10 -> pad to 16 (g = 8)
    weight = jax.random.normal(k_w, (embed_dim,), dtype=jnp.float32)
    bias = jax.random.normal(k_b, (embed_dim,), dtype=jnp.float32)
    x = jax.random.normal(k_x, (B, N, subset_dim), dtype=jnp.float32)

    out = modified_ln_forward(x, weight, bias, subset_dim)
    out = jax.block_until_ready(out)
    assert out.shape == x.shape
    assert jnp.allclose(out, ref_ln(x, weight, bias, subset_dim),
                        atol=1e-5, rtol=1e-5), "mismatch (packed path)"

    # --- Test 2: d >= 128 (unpacked path), single full block ---------------
    embed_dim2 = 256
    subset_dim2 = 256
    weight2 = jax.random.normal(k_w2, (embed_dim2,), dtype=jnp.float32)
    bias2 = jax.random.normal(k_b2, (embed_dim2,), dtype=jnp.float32)
    x2 = jax.random.normal(k_x2, (3, 5, subset_dim2), dtype=jnp.float32)

    out2 = modified_ln_forward(x2, weight2, bias2, subset_dim2)
    out2 = jax.block_until_ready(out2)
    assert out2.shape == x2.shape
    assert jnp.allclose(out2, ref_ln(x2, weight2, bias2, subset_dim2),
                        atol=1e-5, rtol=1e-5), "mismatch (unpacked path)"

    # --- Test 3: default-config d=192, multi-tile grid with ragged tail ----
    embed_dim3 = 192
    subset_dim3 = 192
    weight3 = jax.random.normal(k_w3, (embed_dim3,), dtype=jnp.float32)
    bias3 = jax.random.normal(k_b3, (embed_dim3,), dtype=jnp.float32)
    x3 = jax.random.normal(k_x3, (37, subset_dim3), dtype=jnp.float32)  # 37 rows

    out3 = modified_ln_forward(x3, weight3, bias3, subset_dim3)
    out3 = jax.block_until_ready(out3)
    assert out3.shape == x3.shape
    assert jnp.allclose(out3, ref_ln(x3, weight3, bias3, subset_dim3),
                        atol=1e-5, rtol=1e-5), "mismatch (ragged grid path)"

    print("KERNEL_OK")
</pallas_src>

<mosaic_0001>
module attributes {stable_mosaic.version = 11 : i64} {
  func.func @_ln_packed_kernel(%arg0: i32, %arg1: memref<2x128xf32, #tpu.memory_space<vmem>>, %arg2: memref<1x128xf32, #tpu.memory_space<vmem>>, %arg3: memref<1x128xf32, #tpu.memory_space<vmem>>, %arg4: memref<2x128xf32, #tpu.memory_space<vmem>>) attributes {dimension_semantics = [#tpu.dimension_semantics<parallel>], iteration_bounds = array<i64: 1>, scalar_prefetch = 0 : i64, scratch_operands = 0 : i64, tpu.core_type = #tpu.core_type<tc>, window_params = [{transform_indices = @transform_0, window_bounds = array<i64: 2, 128>}, {pipeline_mode = #tpu.pipeline_mode<synchronous>, transform_indices = @transform_1, window_bounds = array<i64: 1, 128>}, {pipeline_mode = #tpu.pipeline_mode<synchronous>, transform_indices = @transform_2, window_bounds = array<i64: 1, 128>}, {transform_indices = @transform_3, window_bounds = array<i64: 2, 128>}]} {
    %c0 = arith.constant 0 : index
    %c0_0 = arith.constant 0 : index
    %0 = vector.load %arg1[%c0, %c0_0] : memref<2x128xf32, #tpu.memory_space<vmem>>, vector<2x128xf32>
    %1 = arith.mulf %0, %0 : vector<2x128xf32>
    %2 = tpu.iota {dimensions = array<i32: 1>} : vector<2x128xi32>
    %c1_i32 = arith.constant 1 : i32
    %3 = vector.broadcast %c1_i32 : i32 to vector<2x128xi32>
    %4 = arith.andi %2, %3 : vector<2x128xi32>
    %c0_i32 = arith.constant 0 : i32
    %5 = vector.broadcast %c0_i32 : i32 to vector<2x128xi32>
    %6 = arith.cmpi ne, %4, %5 : vector<2x128xi32>
    %c1_i32_1 = arith.constant 1 : i32
    %7 = tpu.dynamic_rotate %0 by %c1_i32_1 dim 1 : vector<2x128xf32>, i32 -> vector<2x128xf32>
    %c127_i32 = arith.constant 127 : i32
    %8 = tpu.dynamic_rotate %0 by %c127_i32 dim 1 : vector<2x128xf32>, i32 -> vector<2x128xf32>
    %9 = arith.select %6, %7, %8 : vector<2x128xi1>, vector<2x128xf32>
    %10 = arith.addf %0, %9 : vector<2x128xf32>
    %c1_i32_2 = arith.constant 1 : i32
    %11 = tpu.dynamic_rotate %1 by %c1_i32_2 dim 1 : vector<2x128xf32>, i32 -> vector<2x128xf32>
    %c127_i32_3 = arith.constant 127 : i32
    %12 = tpu.dynamic_rotate %1 by %c127_i32_3 dim 1 : vector<2x128xf32>, i32 -> vector<2x128xf32>
    %13 = arith.select %6, %11, %12 : vector<2x128xi1>, vector<2x128xf32>
    %14 = arith.addf %1, %13 : vector<2x128xf32>
    %c2_i32 = arith.constant 2 : i32
    %15 = vector.broadcast %c2_i32 : i32 to vector<2x128xi32>
    %16 = arith.andi %2, %15 : vector<2x128xi32>
    %c0_i32_4 = arith.constant 0 : i32
    %17 = vector.broadcast %c0_i32_4 : i32 to vector<2x128xi32>
    %18 = arith.cmpi ne, %16, %17 : vector<2x128xi32>
    %c2_i32_5 = arith.constant 2 : i32
    %19 = tpu.dynamic_rotate %10 by %c2_i32_5 dim 1 : vector<2x128xf32>, i32 -> vector<2x128xf32>
    %c126_i32 = arith.constant 126 : i32
    %20 = tpu.dynamic_rotate %10 by %c126_i32 dim 1 : vector<2x128xf32>, i32 -> vector<2x128xf32>
    %21 = arith.select %18, %19, %20 : vector<2x128xi1>, vector<2x128xf32>
    %22 = arith.addf %10, %21 : vector<2x128xf32>
    %c2_i32_6 = arith.constant 2 : i32
    %23 = tpu.dynamic_rotate %14 by %c2_i32_6 dim 1 : vector<2x128xf32>, i32 -> vector<2x128xf32>
    %c126_i32_7 = arith.constant 126 : i32
    %24 = tpu.dynamic_rotate %14 by %c126_i32_7 dim 1 : vector<2x128xf32>, i32 -> vector<2x128xf32>
    %25 = arith.select %18, %23, %24 : vector<2x128xi1>, vector<2x128xf32>
    %26 = arith.addf %14, %25 : vector<2x128xf32>
    %c4_i32 = arith.constant 4 : i32
    %27 = vector.broadcast %c4_i32 : i32 to vector<2x128xi32>
    %28 = arith.andi %2, %27 : vector<2x128xi32>
    %c0_i32_8 = arith.constant 0 : i32
    %29 = vector.broadcast %c0_i32_8 : i32 to vector<2x128xi32>
    %30 = arith.cmpi ne, %28, %29 : vector<2x128xi32>
    %c4_i32_9 = arith.constant 4 : i32
    %31 = tpu.dynamic_rotate %22 by %c4_i32_9 dim 1 : vector<2x128xf32>, i32 -> vector<2x128xf32>
    %c124_i32 = arith.constant 124 : i32
    %32 = tpu.dynamic_rotate %22 by %c124_i32 dim 1 : vector<2x128xf32>, i32 -> vector<2x128xf32>
    %33 = arith.select %30, %31, %32 : vector<2x128xi1>, vector<2x128xf32>
    %34 = arith.addf %22, %33 : vector<2x128xf32>
    %c4_i32_10 = arith.constant 4 : i32
    %35 = tpu.dynamic_rotate %26 by %c4_i32_10 dim 1 : vector<2x128xf32>, i32 -> vector<2x128xf32>
    %c124_i32_11 = arith.constant 124 : i32
    %36 = tpu.dynamic_rotate %26 by %c124_i32_11 dim 1 : vector<2x128xf32>, i32 -> vector<2x128xf32>
    %37 = arith.select %30, %35, %36 : vector<2x128xi1>, vector<2x128xf32>
    %38 = arith.addf %26, %37 : vector<2x128xf32>
    %c8_i32 = arith.constant 8 : i32
    %39 = vector.broadcast %c8_i32 : i32 to vector<2x128xi32>
    %40 = arith.andi %2, %39 : vector<2x128xi32>
    %c0_i32_12 = arith.constant 0 : i32
    %41 = vector.broadcast %c0_i32_12 : i32 to vector<2x128xi32>
    %42 = arith.cmpi ne, %40, %41 : vector<2x128xi32>
    %c8_i32_13 = arith.constant 8 : i32
    %43 = tpu.dynamic_rotate %34 by %c8_i32_13 dim 1 : vector<2x128xf32>, i32 -> vector<2x128xf32>
    %c120_i32 = arith.constant 120 : i32
    %44 = tpu.dynamic_rotate %34 by %c120_i32 dim 1 : vector<2x128xf32>, i32 -> vector<2x128xf32>
    %45 = arith.select %42, %43, %44 : vector<2x128xi1>, vector<2x128xf32>
    %46 = arith.addf %34, %45 : vector<2x128xf32>
    %c8_i32_14 = arith.constant 8 : i32
    %47 = tpu.dynamic_rotate %38 by %c8_i32_14 dim 1 : vector<2x128xf32>, i32 -> vector<2x128xf32>
    %c120_i32_15 = arith.constant 120 : i32
    %48 = tpu.dynamic_rotate %38 by %c120_i32_15 dim 1 : vector<2x128xf32>, i32 -> vector<2x128xf32>
    %49 = arith.select %42, %47, %48 : vector<2x128xi1>, vector<2x128xf32>
    %50 = arith.addf %38, %49 : vector<2x128xf32>
    %cst = arith.constant 6.250000e-02 : f32
    %51 = vector.broadcast %cst : f32 to vector<2x128xf32>
    %52 = arith.mulf %46, %51 : vector<2x128xf32>
    %cst_16 = arith.constant 6.250000e-02 : f32
    %53 = vector.broadcast %cst_16 : f32 to vector<2x128xf32>
    %54 = arith.mulf %50, %53 : vector<2x128xf32>
    %55 = arith.mulf %52, %52 : vector<2x128xf32>
    %56 = arith.subf %54, %55 : vector<2x128xf32>
    %cst_17 = arith.constant 0.000000e+00 : f32
    %57 = vector.broadcast %cst_17 : f32 to vector<2x128xf32>
    %58 = arith.maximumf %56, %57 : vector<2x128xf32>
    %cst_18 = arith.constant 9.99999974E-6 : f32
    %59 = vector.broadcast %cst_18 : f32 to vector<2x128xf32>
    %60 = arith.addf %58, %59 : vector<2x128xf32>
    %61 = math.rsqrt %60 : vector<2x128xf32>
    %c0_19 = arith.constant 0 : index
    %c0_20 = arith.constant 0 : index
    %62 = vector.load %arg2[%c0_19, %c0_20] : memref<1x128xf32, #tpu.memory_space<vmem>>, vector<1x128xf32>
    %c0_21 = arith.constant 0 : index
    %c0_22 = arith.constant 0 : index
    %63 = vector.load %arg3[%c0_21, %c0_22] : memref<1x128xf32, #tpu.memory_space<vmem>>, vector<1x128xf32>
    %64 = arith.subf %0, %52 : vector<2x128xf32>
    %65 = arith.mulf %64, %61 : vector<2x128xf32>
    %66 = vector.broadcast %62 : vector<1x128xf32> to vector<2x128xf32>
    %67 = arith.mulf %65, %66 : vector<2x128xf32>
    %68 = vector.broadcast %63 : vector<1x128xf32> to vector<2x128xf32>
    %69 = arith.addf %67, %68 : vector<2x128xf32>
    %c0_23 = arith.constant 0 : index
    %c0_24 = arith.constant 0 : index
    %70 = vector.load %arg4[%c0_23, %c0_24] : memref<2x128xf32, #tpu.memory_space<vmem>>, vector<2x128xf32>
    tpu.vector_store %arg4[%c0_23, %c0_24], %69 {strides = array<i32>} : memref<2x128xf32, #tpu.memory_space<vmem>>, vector<2x128xf32>,
    return
  }
  func.func @transform_0(%arg0: i32) -> (i32, i32) {
    %c0_i32 = arith.constant 0 : i32
    %c0_i32_0 = arith.constant 0 : i32
    return %arg0, %c0_i32 : i32, i32
  }
  func.func @transform_1(%arg0: i32) -> (i32, i32) {
    %c0_i32 = arith.constant 0 : i32
    %c0_i32_0 = arith.constant 0 : i32
    %c0_i32_1 = arith.constant 0 : i32
    return %c0_i32, %c0_i32_0 : i32, i32
  }
  func.func @transform_2(%arg0: i32) -> (i32, i32) {
    %c0_i32 = arith.constant 0 : i32
    %c0_i32_0 = arith.constant 0 : i32
    %c0_i32_1 = arith.constant 0 : i32
    return %c0_i32, %c0_i32_0 : i32, i32
  }
  func.func @transform_3(%arg0: i32) -> (i32, i32) {
    %c0_i32 = arith.constant 0 : i32
    %c0_i32_0 = arith.constant 0 : i32
    return %arg0, %c0_i32 : i32, i32
  }
}

</mosaic_0001>

<llo_original>
// kernel: tpu_custom_call.1
$region0: #{tpu_custom_call.1}
  #allocation0 [shape = 'u32[]', space=smem, size = 0x4, offset = 0x4, fixed_abs, tag = 'smem constant byte address 0x4 - core index']
  #allocation1 [shape = 'u32[144,128]{1,0:T(1,128)}', space=vmem, size = 0x12000, scoped, tag = 'internal scratch']
  %s0 = inlined_call_operand.hbm [shape: f32[2,128], index: 0, kind: input, shape index: {}]
  %s1 = inlined_call_operand.vmem [shape: f32[1,128], index: 1, kind: input, shape index: {}]
  %s2 = inlined_call_operand.vmem [shape: f32[1,128], index: 2, kind: input, shape index: {}]
  %s3 = inlined_call_operand.hbm [shape: f32[2,128], index: 3, kind: output, shape index: {}]
  %s4 = sld [smem:[#allocation0]]
  $region26: #{tpu_custom_call.1} parent=0
    _
  %s6 = ssub.s32 1, %s4
  %s7 = scalar_select 0, %s6, %s4
  $region1: #{tpu_custom_call.1} parent=0
    #allocation2 [shape = 'u8[1024]{0}', space=vmem, size = 0x400, scoped, tag = 'input window, operand 0, single buffered']
    #allocation3 [shape = 's32[1]{0}', space=sflag, size = 0x4, scoped, tag = 'scoped memory for tpu_custom_call.1']
    #allocation4 [shape = 's32[1]{0}', space=sflag, size = 0x4, scoped, tag = 'scoped memory for tpu_custom_call.1']
    #allocation5 [shape = 'u8[1024]{0}', space=vmem, size = 0x400, scoped, tag = 'output window, operand 0, single buffered']
    %8 = vsyncpa [#allocation3], 0
    %9 = vsyncpa [#allocation4], 0
    // Predicated region
    $region2: #{tpu_custom_call.1} parent=1 // pred_check
      _
    $region3: #{tpu_custom_call.1} parent=1 // pred_check_branch
      %11 = sbr.rel (0) target = $region5
    $region4: #{tpu_custom_call.1} parent=1 // pred_region
      %s13 = ssub.s32 32, 32
      %14 = vsyncadd [#allocation3], %s13
      %s16 = sshll.u32 [#allocation2], 4
      %s17 = int_to_ptr.vmem [resolvable:$true] %s16
      %19 = dma.hbm_to_vmem [thread:$0]  %s0, 32, %s17, [#allocation3]
    $region5: #{tpu_custom_call.1} parent=1 // pred_fallthru
      _
    // Predicated region
    $region6: #{tpu_custom_call.1} parent=1 // pred_check
      _
    $region7: #{tpu_custom_call.1} parent=1 // pred_check_branch
      %21 = sbr.rel (0) target = $region9
    $region8: #{tpu_custom_call.1} parent=1 // pred_region
      _
    $region9: #{tpu_custom_call.1} parent=1 // pred_fallthru
      _
    // Predicated region
    $region10: #{tpu_custom_call.1} parent=1 // pred_check
      _
    $region11: #{tpu_custom_call.1} parent=1 // pred_check_branch
      %23 = sbr.rel (0) target = $region13
    $region12: #{tpu_custom_call.1} parent=1 // pred_region
      _
    $region13: #{tpu_custom_call.1} parent=1 // pred_fallthru
      _
    // Predicated region
    $region14: #{tpu_custom_call.1} parent=1 // pred_check
      _
    $region15: #{tpu_custom_call.1} parent=1 // pred_check_branch
      %25 = sbr.rel (0) target = $region17
    $region16: #{tpu_custom_call.1} parent=1 // pred_region
      %26 = dma.done [#allocation3], 32
    $region17: #{tpu_custom_call.1} parent=1 // pred_fallthru
      _
    %v27 = vld [vmem:[#allocation2] sm:$0x3]
    %v28 = vmul.f32 %v27, %v27
    %v29 = vlaneseq
    %v30 = vand.u32 %v29, 127
    %v31 = vand.u32 %v30, 1
    %vm32 = vcmp.ne.s32.totalorder %v31, 0
    %33 = vrot.lane.b32.xlu0 %v27, 1
    %v34 = vpop.permute.xlu0 %33
    %35 = vrot.lane.b32.xlu0 %v27, 127
    %v36 = vpop.permute.xlu0 %35
    %v37 = vsel %vm32, %v34, %v36
    %v38 = vadd.f32 %v27, %v37
    %39 = vrot.lane.b32.xlu0 %v28, 1
    %v40 = vpop.permute.xlu0 %39
    %41 = vrot.lane.b32.xlu0 %v28, 127
    %v42 = vpop.permute.xlu0 %41
    %v43 = vsel %vm32, %v40, %v42
    %v44 = vadd.f32 %v28, %v43
    %v45 = vand.u32 %v30, 2
    %vm46 = vcmp.ne.s32.totalorder %v45, 0
    %47 = vrot.lane.b32.xlu0 %v38, 2
    %v48 = vpop.permute.xlu0 %47
    %49 = vrot.lane.b32.xlu0 %v38, 126
    %v50 = vpop.permute.xlu0 %49
    %v51 = vsel %vm46, %v48, %v50
    %v52 = vadd.f32 %v38, %v51
    %53 = vrot.lane.b32.xlu0 %v44, 2
    %v54 = vpop.permute.xlu0 %53
    %55 = vrot.lane.b32.xlu0 %v44, 126
    %v56 = vpop.permute.xlu0 %55
    %v57 = vsel %vm46, %v54, %v56
    %v58 = vadd.f32 %v44, %v57
    %v59 = vand.u32 %v30, 4
    %vm60 = vcmp.ne.s32.totalorder %v59, 0
    %61 = vrot.lane.b32.xlu0 %v52, 4
    %v62 = vpop.permute.xlu0 %61
    %63 = vrot.lane.b32.xlu0 %v52, 124
    %v64 = vpop.permute.xlu0 %63
    %v65 = vsel %vm60, %v62, %v64
    %v66 = vadd.f32 %v52, %v65
    %67 = vrot.lane.b32.xlu0 %v58, 4
    %v68 = vpop.permute.xlu0 %67
    %69 = vrot.lane.b32.xlu0 %v58, 124
    %v70 = vpop.permute.xlu0 %69
    %v71 = vsel %vm60, %v68, %v70
    %v72 = vadd.f32 %v58, %v71
    %v73 = vand.u32 %v30, 8
    %vm74 = vcmp.ne.s32.totalorder %v73, 0
    %75 = vrot.lane.b32.xlu0 %v66, 8
    %v76 = vpop.permute.xlu0 %75
    %77 = vrot.lane.b32.xlu0 %v66, 120
    %v78 = vpop.permute.xlu0 %77
    %v79 = vsel %vm74, %v76, %v78
    %v80 = vadd.f32 %v66, %v79
    %81 = vrot.lane.b32.xlu0 %v72, 8
    %v82 = vpop.permute.xlu0 %81
    %83 = vrot.lane.b32.xlu0 %v72, 120
    %v84 = vpop.permute.xlu0 %83
    %v85 = vsel %vm74, %v82, %v84
    %v86 = vadd.f32 %v72, %v85
    %v87 = vmul.f32 %v80, 0.0625
    %v88 = vmul.f32 %v86, 0.0625
    %v89 = vmul.f32 %v87, %v87
    %v90 = vsub.f32 %v88, %v89
    %v91 = vmax.f32 %v90, 0.0
    %v92 = vadd.f32 %v91, 1e-05
    %v93 = vrsqrt.pop %v92
    %v94 = vld [vmem:[%s1] sm:$0x1]
    %v95 = vld [vmem:[%s2] sm:$0x1]
    %v96 = vsub.f32 %v27, %v87
    %v97 = vmul.f32 %v96, %v93
    %v99 = vlaneseq
    %v100 = vshrl.u32 %v99, 7
    %v101 = vsub.s32 0, %v100
    %v102 = vrot.slane %v94, %v101
    %v104 = vmul.f32 %v97, %v102
    %v106 = vlaneseq
    %v107 = vshrl.u32 %v106, 7
    %v108 = vsub.s32 0, %v107
    %v109 = vrot.slane %v95, %v108
    %v111 = vadd.f32 %v104, %v109
    %112 = vst [vmem:[#allocation5] sm:$0x3] %v111
    // Predicated region
    $region18: #{tpu_custom_call.1} parent=1 // pred_check
      _
    $region19: #{tpu_custom_call.1} parent=1 // pred_check_branch
      %114 = sbr.rel (0) target = $region21
    $region20: #{tpu_custom_call.1} parent=1 // pred_region
      %s116 = ssub.s32 32, 32
      %117 = vsyncadd [#allocation4], %s116
      %s119 = sshll.u32 [#allocation5], 4
      %s120 = int_to_ptr.vmem [resolvable:$true] %s119
      %122 = dma.vmem_to_hbm [thread:$0]  %s120, 32, %s3, [#allocation4]
    $region21: #{tpu_custom_call.1} parent=1 // pred_fallthru
      _
    // Predicated region
    $region22: #{tpu_custom_call.1} parent=1 // pred_check
      _
    $region23: #{tpu_custom_call.1} parent=1 // pred_check_branch
      %124 = sbr.rel (0) target = $region25
    $region24: #{tpu_custom_call.1} parent=1 // pred_region
      %125 = dma.done [#allocation4], 32
    $region25: #{tpu_custom_call.1} parent=1 // pred_fallthru
      _
    %126 = vsyncpa [#allocation3], 1
    %127 = vsyncpa [#allocation4], 1

</llo_original>
